<compile_context>
chip_gen: v5e
topology: v5e:2x2
jax: 0.10.0
libtpu: 0.0.40
codegen_flags: <defaults>
</compile_context>

<pallas_src>
from typing import NamedTuple

import jax
import jax.numpy as jnp
from jax.experimental import pallas as pl
from jax.experimental.pallas import tpu as pltpu

_LANE = 128
_SUBLANE = 16  # bf16 sublane packing -> keep row tiles multiples of 16


def _round_up(x, m):
    return ((x + m - 1) // m) * m


def _vmem_budget_bytes():
    """Usable VMEM budget for this kernel's tiles (generation-aware)."""
    try:
        cap = int(pltpu.get_tpu_info().vmem_capacity_bytes)
    except Exception:  # not on TPU / API unavailable -> conservative v7x-sized
        cap = 64 << 20
    # Leave headroom for compiler scratch + materialized h12/gated intermediates:
    #   64 MiB parts (v7x)      -> ~48 MiB usable
    #  128 MiB parts (v5e/v6e)  -> ~112 MiB usable
    return max(cap - (16 << 20), (cap * 3) // 4)


def _pick_td(D, e_pad, wbytes, weight_budget):
    """Hidden-dim tile. Prefer 256 (fills the MXU on every generation and keeps the
    double-buffered weight tiles small so tm can grow -- the dominant mem-bound
    lever); fall back to 128, then 512; else keep D whole (toy sizes)."""
    for cand in (256, 128, 512):
        if D % cand == 0 and 6 * e_pad * cand * wbytes <= weight_budget:
            return cand
    return D


def _pick_tm(M, e_pad, td, xbytes, obytes, weight_tile_bytes, vmem_budget):
    """Token tile: as large as VMEM allows (cuts per-M-tile weight re-streaming),
    capped at 1024, but always leaving >= 2 tiles on the parallel grid axis so
    v7x's two TensorCores both get work."""
    if M <= 2 * _SUBLANE:
        return M  # tiny problems: single full-extent tile (block == full dim ok)
    avail = max(vmem_budget - weight_tile_bytes, 1 << 20)
    per_row = (e_pad * (2 * xbytes + 2 * obytes + 4)  # dbl-buf x / out + f32 acc
               + 3 * td * 4)                          # h12 / gated intermediates
    tm_cap = max(_SUBLANE, avail // per_row)
    tm = min(1024, tm_cap, _round_up(pl.cdiv(M, 2), _SUBLANE))
    return max(_SUBLANE, (tm // _SUBLANE) * _SUBLANE)


# ----------------------------- kernels -------------------------------------


def _ffn_kernel_acc(x_ref, w12_ref, w3_ref, o_ref, acc_ref):
    """D is tiled over grid axis 1 ("arbitrary"); acc_ref is resident across it."""
    td = w3_ref.shape[0]
    d = pl.program_id(1)

    # One fused MXU pass for both gate projections: (tm, E) @ (E, 2*td).
    h12 = jnp.dot(x_ref[...], w12_ref[...], preferred_element_type=jnp.float32)
    h1 = h12[:, :td]
    h2 = h12[:, td:]
    gated = (h1 * jax.nn.sigmoid(h1) * h2).astype(w3_ref.dtype)  # SiLU gate in f32
    partial = jnp.dot(gated, w3_ref[...], preferred_element_type=jnp.float32)

    @pl.when(d == 0)
    def _():  # fold init into the first step: no zero-fill pass, no extra add
        acc_ref[...] = partial

    @pl.when(d > 0)
    def _():
        acc_ref[...] = acc_ref[...] + partial

    @pl.when(d == pl.num_programs(1) - 1)
    def _():
        o_ref[...] = acc_ref[...].astype(o_ref.dtype)


def _ffn_kernel_noacc(x_ref, w12_ref, w3_ref, o_ref):
    """nd == 1: whole hidden dim in one tile -> no accumulator scratch needed."""
    td = w3_ref.shape[0]
    h12 = jnp.dot(x_ref[...], w12_ref[...], preferred_element_type=jnp.float32)
    h1 = h12[:, :td]
    h2 = h12[:, td:]
    gated = (h1 * jax.nn.sigmoid(h1) * h2).astype(w3_ref.dtype)
    o_ref[...] = jnp.dot(gated, w3_ref[...],
                         preferred_element_type=jnp.float32).astype(o_ref.dtype)


# ------------------------- weight packing (one-time) ------------------------


class PackedFFN(NamedTuple):
    w12: jax.Array     # (E_pad, nd * 2 * td): per d-tile [W1 | W2], (in, out) layout
    w3t: jax.Array     # (D, E_pad)
    embed_dim: int     # E (un-padded)
    e_pad: int         # E rounded up to a lane multiple (128)
    hidden_dim: int    # D
    td: int            # hidden-dim tile


def pack_ffn_weights(w1, w2, w3, compute_dtype=jnp.bfloat16):
    """One-time weight packing (hoisted out of the per-call path).

    w1, w2 : (D, E)  -- PyTorch l1.weight / l2.weight, (out, in) layout
    w3     : (E, D)  -- PyTorch final.weight
    """
    w1 = jnp.asarray(w1)
    w2 = jnp.asarray(w2)
    w3 = jnp.asarray(w3)
    D, E = w1.shape
    wbytes = jnp.dtype(compute_dtype).itemsize
    e_pad = E if E % _LANE == 0 else _round_up(E, _LANE)
    td = _pick_td(D, e_pad, wbytes, _vmem_budget_bytes() // 2)
    nd = D // td  # td divides D by construction (or td == D)

    w1_t = w1.T.astype(compute_dtype)   # (E, D)
    w2_t = w2.T.astype(compute_dtype)   # (E, D)
    w3_t = w3.T.astype(compute_dtype)   # (D, E)
    if e_pad != E:  # zero-pad E: identical math, lane-dense stores / full MXU fill
        w1_t = jnp.pad(w1_t, ((0, e_pad - E), (0, 0)))
        w2_t = jnp.pad(w2_t, ((0, e_pad - E), (0, 0)))
        w3_t = jnp.pad(w3_t, ((0, 0), (0, e_pad - E)))

    w12 = jnp.concatenate(
        [w1_t.reshape(e_pad, nd, td), w2_t.reshape(e_pad, nd, td)], axis=2
    ).reshape(e_pad, nd * 2 * td)
    return PackedFFN(w12, w3_t, E, e_pad, D, td)


# ------------------------------ forward ------------------------------------


def _ffn_forward(x, packed: PackedFFN):
    w12, w3t, E, e_pad, D, td = packed
    orig_shape = x.shape
    out_dtype = x.dtype
    cdt = w12.dtype
    nd = D // td

    x2d = x.reshape(-1, E).astype(cdt)
    M = x2d.shape[0]
    if e_pad != E:
        x2d = jnp.pad(x2d, ((0, 0), (0, e_pad - E)))

    xbytes = x2d.dtype.itemsize
    obytes = jnp.dtype(out_dtype).itemsize
    wbytes = w12.dtype.itemsize
    vmem_budget = _vmem_budget_bytes()

    # Double-buffered [W1|W2] + W3 d-tiles.
    weight_tile_bytes = 2 * (e_pad * 2 * td + td * e_pad) * wbytes
    tm = _pick_tm(M, e_pad, td, xbytes, obytes, weight_tile_bytes, vmem_budget)
    nm = pl.cdiv(M, tm)

    tile_bytes = (2 * tm * e_pad * (xbytes + obytes)   # dbl-buffered x / out tiles
                  + weight_tile_bytes
                  + tm * e_pad * 4                     # f32 accumulator scratch
                  + tm * 3 * td * 4)                   # h12 / gated intermediates
    vmem_limit = int(min(vmem_budget,
                         max(tile_bytes * 5 // 4 + (2 << 20), 16 << 20)))

    cost = pl.CostEstimate(
        flops=6 * M * e_pad * D,           # 2*M*E*(2D) gate + 2*M*D*E final
        transcendentals=M * D,             # sigmoid
        # Weights are re-streamed from HBM once per M-tile.
        bytes_accessed=(x2d.size * xbytes + M * e_pad * obytes
                        + (w12.size + w3t.size) * wbytes * nm),
    )

    if nd == 1:
        grid = (nm,)
        in_specs = [
            pl.BlockSpec((tm, e_pad), lambda i: (i, 0)),        # x tile
            pl.BlockSpec((e_pad, 2 * td), lambda i: (0, 0)),    # [W1|W2] (whole)
            pl.BlockSpec((td, e_pad), lambda i: (0, 0)),        # W3 (whole)
        ]
        out_spec = pl.BlockSpec((tm, e_pad), lambda i: (i, 0))
        scratch = []
        kernel = _ffn_kernel_noacc
        semantics = ("parallel",)
    else:
        grid = (nm, nd)
        in_specs = [
            pl.BlockSpec((tm, e_pad), lambda i, d: (i, 0)),     # x tile
            pl.BlockSpec((e_pad, 2 * td), lambda i, d: (0, d)),  # [W1|W2] d-tile
            pl.BlockSpec((td, e_pad), lambda i, d: (d, 0)),      # W3 d-tile
        ]
        out_spec = pl.BlockSpec((tm, e_pad), lambda i, d: (i, 0))  # resident over d
        scratch = [pltpu.VMEM((tm, e_pad), jnp.float32)]
        kernel = _ffn_kernel_acc
        semantics = ("parallel", "arbitrary")

    out = pl.pallas_call(
        kernel,
        out_shape=jax.ShapeDtypeStruct((M, e_pad), out_dtype),
        grid_spec=pltpu.PrefetchScalarGridSpec(
            num_scalar_prefetch=0,
            grid=grid,
            in_specs=in_specs,
            out_specs=out_spec,
            scratch_shapes=scratch,
        ),
        compiler_params=pltpu.CompilerParams(
            dimension_semantics=semantics,
            vmem_limit_bytes=vmem_limit,
        ),
        cost_estimate=cost,
    )(x2d, w12, w3t)

    if e_pad != E:
        out = out[:, :E]
    return out.reshape(orig_shape)


def make_feed_forward(w1, w2, w3, compute_dtype=jnp.bfloat16):
    """Pre-pack weights ONCE and return apply(x). Preferred production entry point."""
    packed = pack_ffn_weights(w1, w2, w3, compute_dtype)

    def apply(x):
        return _ffn_forward(x, packed)

    return apply


def feed_forward_pallas(x, w1, w2, w3, compute_dtype=jnp.bfloat16):
    """Convenience one-shot wrapper (re-packs weights every call; prefer
    make_feed_forward for repeated use)."""
    return _ffn_forward(x, pack_ffn_weights(w1, w2, w3, compute_dtype))


# ------------------------------- self-test ----------------------------------


if __name__ == "__main__":
    def reference(x, w1, w2, w3, quantize=True):
        # Pure-JAX reference matching the PyTorch forward; optionally with the
        # same bf16 input/weight quantization the kernel applies.
        q = (lambda a: a.astype(jnp.bfloat16).astype(jnp.float32)) if quantize \
            else (lambda a: a)
        h1 = q(x) @ q(w1).T
        h2 = q(x) @ q(w2).T
        gated = h1 * jax.nn.sigmoid(h1) * h2
        return q(gated) @ q(w3).T

    key = jax.random.PRNGKey(0)

    # ---- Test 1: module toy config (embedding_dim=32, widening_factor=4) ----
    B, S, E, WF = 2, 8, 32, 4
    D = E * WF
    kx, k1, k2, k3, key = jax.random.split(key, 5)
    x = jax.random.normal(kx, (B, S, E), dtype=jnp.float32)
    w1 = jax.random.normal(k1, (D, E), dtype=jnp.float32) * 0.05   # l1.weight (out, in)
    w2 = jax.random.normal(k2, (D, E), dtype=jnp.float32) * 0.05   # l2.weight
    w3 = jax.random.normal(k3, (E, D), dtype=jnp.float32) * 0.05   # final.weight

    ffn = make_feed_forward(w1, w2, w3)   # packs once (bf16, E padded 32 -> 128)
    out = jax.block_until_ready(ffn(x))
    assert out.shape == (B, S, E) and out.dtype == x.dtype
    assert jnp.allclose(out, reference(x, w1, w2, w3), atol=2e-3, rtol=2e-2)
    assert jnp.allclose(out, reference(x, w1, w2, w3, quantize=False),
                        atol=1e-2, rtol=1e-1)

    # ---- Test 2: exercises the D-tiled accumulator + multi-M-tile path ----
    B2, S2, E2, WF2 = 4, 128, 256, 4
    D2 = E2 * WF2
    kx, k1, k2, k3, key = jax.random.split(key, 5)
    x2 = jax.random.normal(kx, (B2, S2, E2), dtype=jnp.float32)
    w1b = jax.random.normal(k1, (D2, E2), dtype=jnp.float32) * 0.02
    w2b = jax.random.normal(k2, (D2, E2), dtype=jnp.float32) * 0.02
    w3b = jax.random.normal(k3, (E2, D2), dtype=jnp.float32) * 0.02

    out2 = jax.block_until_ready(make_feed_forward(w1b, w2b, w3b)(x2))
    assert out2.shape == (B2, S2, E2)
    assert jnp.allclose(out2, reference(x2, w1b, w2b, w3b), atol=3e-3, rtol=3e-2)

    print("KERNEL_OK")
</pallas_src>

<mosaic_0001>
module attributes {stable_mosaic.version = 11 : i64} {
  func.func @_ffn_kernel_noacc(%arg0: i32, %arg1: memref<16x128xbf16, #tpu.memory_space<vmem>>, %arg2: memref<128x256xbf16, #tpu.memory_space<vmem>>, %arg3: memref<128x128xbf16, #tpu.memory_space<vmem>>, %arg4: memref<16x128xf32, #tpu.memory_space<vmem>>) attributes {dimension_semantics = [#tpu.dimension_semantics<parallel>], iteration_bounds = array<i64: 1>, scalar_prefetch = 0 : i64, scratch_operands = 0 : i64, tpu.core_type = #tpu.core_type<tc>, window_params = [{transform_indices = @transform_0, window_bounds = array<i64: 16, 128>}, {pipeline_mode = #tpu.pipeline_mode<synchronous>, transform_indices = @transform_1, window_bounds = array<i64: 128, 256>}, {pipeline_mode = #tpu.pipeline_mode<synchronous>, transform_indices = @transform_2, window_bounds = array<i64: 128, 128>}, {transform_indices = @transform_3, window_bounds = array<i64: 16, 128>}]} {
    %c0 = arith.constant 0 : index
    %c0_0 = arith.constant 0 : index
    %0 = vector.load %arg1[%c0, %c0_0] : memref<16x128xbf16, #tpu.memory_space<vmem>>, vector<16x128xbf16>
    %c0_1 = arith.constant 0 : index
    %c0_2 = arith.constant 0 : index
    %1 = vector.load %arg2[%c0_1, %c0_2] : memref<128x256xbf16, #tpu.memory_space<vmem>>, vector<128x256xbf16>
    %cst = arith.constant dense<0.000000e+00> : vector<16x256xf32>
    %2 = tpu.matmul %0, %1, %cst {dimension_numbers = #tpu.dot_dimension_numbers<[1], [0], [0], [1], [0, 0, 1, 1], [], []>} : vector<16x128xbf16>, vector<128x256xbf16>, vector<16x256xf32> -> vector<16x256xf32>
    %3 = vector.extract_strided_slice %2 {offsets = [0, 0], sizes = [16, 128], strides = [1, 1]} : vector<16x256xf32> to vector<16x128xf32>
    %4 = vector.extract_strided_slice %2 {offsets = [0, 128], sizes = [16, 128], strides = [1, 1]} : vector<16x256xf32> to vector<16x128xf32>
    %5 = arith.negf %3 : vector<16x128xf32>
    %6 = math.exp %5 : vector<16x128xf32>
    %cst_3 = arith.constant 1.000000e+00 : f32
    %7 = vector.broadcast %cst_3 : f32 to vector<16x128xf32>
    %8 = arith.addf %7, %6 : vector<16x128xf32>
    %9 = arith.divf %7, %8 : vector<16x128xf32>
    %10 = arith.mulf %3, %9 : vector<16x128xf32>
    %11 = arith.mulf %10, %4 : vector<16x128xf32>
    %12 = arith.truncf %11 : vector<16x128xf32> to vector<16x128xbf16>
    %c0_4 = arith.constant 0 : index
    %c0_5 = arith.constant 0 : index
    %13 = vector.load %arg3[%c0_4, %c0_5] : memref<128x128xbf16, #tpu.memory_space<vmem>>, vector<128x128xbf16>
    %cst_6 = arith.constant dense<0.000000e+00> : vector<16x128xf32>
    %14 = tpu.matmul %12, %13, %cst_6 {dimension_numbers = #tpu.dot_dimension_numbers<[1], [0], [0], [1], [0, 0, 1, 1], [], []>} : vector<16x128xbf16>, vector<128x128xbf16>, vector<16x128xf32> -> vector<16x128xf32>
    %c0_7 = arith.constant 0 : index
    %c0_8 = arith.constant 0 : index
    %15 = vector.load %arg4[%c0_7, %c0_8] : memref<16x128xf32, #tpu.memory_space<vmem>>, vector<16x128xf32>
    tpu.vector_store %arg4[%c0_7, %c0_8], %14 {strides = array<i32>} : memref<16x128xf32, #tpu.memory_space<vmem>>, vector<16x128xf32>,
    return
  }
  func.func @transform_0(%arg0: i32) -> (i32, i32) {
    %c0_i32 = arith.constant 0 : i32
    %c0_i32_0 = arith.constant 0 : i32
    return %arg0, %c0_i32 : i32, i32
  }
  func.func @transform_1(%arg0: i32) -> (i32, i32) {
    %c0_i32 = arith.constant 0 : i32
    %c0_i32_0 = arith.constant 0 : i32
    %c0_i32_1 = arith.constant 0 : i32
    return %c0_i32, %c0_i32_0 : i32, i32
  }
  func.func @transform_2(%arg0: i32) -> (i32, i32) {
    %c0_i32 = arith.constant 0 : i32
    %c0_i32_0 = arith.constant 0 : i32
    %c0_i32_1 = arith.constant 0 : i32
    return %c0_i32, %c0_i32_0 : i32, i32
  }
  func.func @transform_3(%arg0: i32) -> (i32, i32) {
    %c0_i32 = arith.constant 0 : i32
    %c0_i32_0 = arith.constant 0 : i32
    return %arg0, %c0_i32 : i32, i32
  }
}

</mosaic_0001>

<llo_original>
// kernel: tpu_custom_call.1
$region0: #{tpu_custom_call.1}
  #allocation0 [shape = 'u32[]', space=smem, size = 0x4, offset = 0x4, fixed_abs, tag = 'smem constant byte address 0x4 - core index']
  #allocation1 [shape = 'u32[72,128]{1,0:T(1,128)}', space=vmem, size = 0x9000, scoped, tag = 'internal scratch']
  %s0 = inlined_call_operand.hbm [shape: bf16[16,128], index: 0, kind: input, shape index: {}]
  %s1 = inlined_call_operand.hbm [shape: bf16[128,256], index: 1, kind: input, shape index: {}]
  %s2 = inlined_call_operand.hbm [shape: bf16[128,128], index: 2, kind: input, shape index: {}]
  %s3 = inlined_call_operand.hbm [shape: f32[16,128], index: 3, kind: output, shape index: {}]
  %s4 = sld [smem:[#allocation0]]
  $region34: #{tpu_custom_call.1} parent=0
    _
  %s6 = ssub.s32 1, %s4
  %s7 = scalar_select 0, %s6, %s4
  $region1: #{tpu_custom_call.1} parent=0
    #allocation2 [shape = 'u8[4096]{0}', space=vmem, size = 0x1000, scoped, tag = 'input window, operand 0, single buffered']
    #allocation3 [shape = 's32[1]{0}', space=sflag, size = 0x4, scoped, tag = 'scoped memory for tpu_custom_call.1']
    #allocation4 [shape = 's32[1]{0}', space=sflag, size = 0x4, scoped, tag = 'scoped memory for tpu_custom_call.1']
    #allocation5 [shape = 'u8[65536]{0}', space=vmem, size = 0x10000, scoped, tag = 'input window, operand 1, single buffered']
    #allocation6 [shape = 's32[1]{0}', space=sflag, size = 0x4, scoped, tag = 'scoped memory for tpu_custom_call.1']
    #allocation7 [shape = 'u8[32768]{0}', space=vmem, size = 0x8000, scoped, tag = 'input window, operand 2, single buffered']
    #allocation8 [shape = 'u8[8192]{0}', space=vmem, size = 0x2000, scoped, tag = 'output window, operand 0, single buffered']
    %8 = vsyncpa [#allocation3], 0
    %9 = vsyncpa [#allocation6], 0
    %10 = vsyncpa [#allocation4], 0
    // Predicated region
    $region2: #{tpu_custom_call.1} parent=1 // pred_check
      _
    $region3: #{tpu_custom_call.1} parent=1 // pred_check_branch
      %12 = sbr.rel (0) target = $region5
    $region4: #{tpu_custom_call.1} parent=1 // pred_region
      %14 = vsyncadd [#allocation3], 0
      %s15 = sshll.u32 %s0, 4
      %s16 = int_to_ptr.hbm [resolvable:$true] %s15
      %s17 = sshll.u32 [#allocation2], 4
      %s18 = int_to_ptr.vmem [resolvable:$true] %s17
      %23 = dma.hbm_to_vmem [thread:$0]  %s16, 128, %s18, [#allocation3], 64, 64, 4
    $region5: #{tpu_custom_call.1} parent=1 // pred_fallthru
      _
    // Predicated region
    $region6: #{tpu_custom_call.1} parent=1 // pred_check
      _
    $region7: #{tpu_custom_call.1} parent=1 // pred_check_branch
      %25 = sbr.rel (0) target = $region9
    $region8: #{tpu_custom_call.1} parent=1 // pred_region
      %27 = vsyncadd [#allocation6], 0
      %s28 = sshll.u32 %s1, 4
      %s29 = int_to_ptr.hbm [resolvable:$true] %s28
      %s30 = sshll.u32 [#allocation5], 4
      %s31 = int_to_ptr.vmem [resolvable:$true] %s30
      %36 = dma.hbm_to_vmem [thread:$0]  %s29, 2048, %s31, [#allocation6], 128, 128, 8
    $region9: #{tpu_custom_call.1} parent=1 // pred_fallthru
      _
    // Predicated region
    $region10: #{tpu_custom_call.1} parent=1 // pred_check
      _
    $region11: #{tpu_custom_call.1} parent=1 // pred_check_branch
      %38 = sbr.rel (0) target = $region13
    $region12: #{tpu_custom_call.1} parent=1 // pred_region
      %40 = vsyncadd [#allocation6], 0
      %s41 = sshll.u32 %s2, 4
      %s42 = int_to_ptr.hbm [resolvable:$true] %s41
      %s43 = sshll.u32 [#allocation7], 4
      %s44 = int_to_ptr.vmem [resolvable:$true] %s43
      %49 = dma.hbm_to_vmem [thread:$0]  %s42, 1024, %s44, [#allocation6], 64, 64, 4
    $region13: #{tpu_custom_call.1} parent=1 // pred_fallthru
      _
    // Predicated region
    $region14: #{tpu_custom_call.1} parent=1 // pred_check
      _
    $region15: #{tpu_custom_call.1} parent=1 // pred_check_branch
      %51 = sbr.rel (0) target = $region17
    $region16: #{tpu_custom_call.1} parent=1 // pred_region
      %53 = dma.done [#allocation3], 128
    $region17: #{tpu_custom_call.1} parent=1 // pred_fallthru
      _
    // Predicated region
    $region18: #{tpu_custom_call.1} parent=1 // pred_check
      _
    $region19: #{tpu_custom_call.1} parent=1 // pred_check_branch
      %55 = sbr.rel (0) target = $region21
    $region20: #{tpu_custom_call.1} parent=1 // pred_region
      %57 = dma.done [#allocation6], 2048
    $region21: #{tpu_custom_call.1} parent=1 // pred_fallthru
      _
    // Predicated region
    $region22: #{tpu_custom_call.1} parent=1 // pred_check
      _
    $region23: #{tpu_custom_call.1} parent=1 // pred_check_branch
      %59 = sbr.rel (0) target = $region25
    $region24: #{tpu_custom_call.1} parent=1 // pred_region
      %61 = dma.done [#allocation6], 1024
    $region25: #{tpu_custom_call.1} parent=1 // pred_fallthru
      _
    %v62 = vld [vmem:[#allocation2] sm:$0xf]
    %v63 = vld [vmem:[#allocation2 + $0x4] sm:$0xf]
    %v64 = vld [vmem:[#allocation5] sm:$0xff]
    %v65 = vld [vmem:[#allocation5 + $0x8] sm:$0xff]
    %v66 = vld [vmem:[#allocation5 + $0x10] sm:$0xff]
    %v67 = vld [vmem:[#allocation5 + $0x18] sm:$0xff]
    %v68 = vld [vmem:[#allocation5 + $0x20] sm:$0xff]
    %v69 = vld [vmem:[#allocation5 + $0x28] sm:$0xff]
    %v70 = vld [vmem:[#allocation5 + $0x30] sm:$0xff]
    %v71 = vld [vmem:[#allocation5 + $0x38] sm:$0xff]
    %v72 = vld [vmem:[#allocation5 + $0x40] sm:$0xff]
    %v73 = vld [vmem:[#allocation5 + $0x48] sm:$0xff]
    %v74 = vld [vmem:[#allocation5 + $0x50] sm:$0xff]
    %v75 = vld [vmem:[#allocation5 + $0x58] sm:$0xff]
    %v76 = vld [vmem:[#allocation5 + $0x60] sm:$0xff]
    %v77 = vld [vmem:[#allocation5 + $0x68] sm:$0xff]
    %v78 = vld [vmem:[#allocation5 + $0x70] sm:$0xff]
    %v79 = vld [vmem:[#allocation5 + $0x78] sm:$0xff]
    %v82 = vunpack.c.l.b16 %v62
    %v83 = vunpack.c.l.b16 %v63
    %v84 = vpack.c.b16 %v83, %v82
    %v102 = vunpack.c.l.b16 %v64
    %v103 = vunpack.c.h.b16 %v64
    %v104 = vunpack.c.l.b16 %v65
    %v105 = vunpack.c.h.b16 %v65
    %v106 = vunpack.c.l.b16 %v66
    %v107 = vunpack.c.h.b16 %v66
    %v108 = vunpack.c.l.b16 %v67
    %v109 = vunpack.c.h.b16 %v67
    %v110 = vunpack.c.l.b16 %v68
    %v111 = vunpack.c.h.b16 %v68
    %v112 = vunpack.c.l.b16 %v69
    %v113 = vunpack.c.h.b16 %v69
    %v114 = vunpack.c.l.b16 %v70
    %v115 = vunpack.c.h.b16 %v70
    %v116 = vunpack.c.l.b16 %v71
    %v117 = vunpack.c.h.b16 %v71
    %v118 = vunpack.c.l.b16 %v72
    %v119 = vunpack.c.h.b16 %v72
    %v120 = vunpack.c.l.b16 %v73
    %v121 = vunpack.c.h.b16 %v73
    %v122 = vunpack.c.l.b16 %v74
    %v123 = vunpack.c.h.b16 %v74
    %v124 = vunpack.c.l.b16 %v75
    %v125 = vunpack.c.h.b16 %v75
    %v126 = vunpack.c.l.b16 %v76
    %v127 = vunpack.c.h.b16 %v76
    %v128 = vunpack.c.l.b16 %v77
    %v129 = vunpack.c.h.b16 %v77
    %v130 = vunpack.c.l.b16 %v78
    %v131 = vunpack.c.h.b16 %v78
    %v132 = vunpack.c.l.b16 %v79
    %v133 = vunpack.c.h.b16 %v79
    %v134 = vpack.c.b16 %v104, %v102
    %v135 = vpack.c.b16 %v105, %v103
    %v136 = vpack.c.b16 %v108, %v106
    %v137 = vpack.c.b16 %v109, %v107
    %v138 = vpack.c.b16 %v112, %v110
    %v139 = vpack.c.b16 %v113, %v111
    %v140 = vpack.c.b16 %v116, %v114
    %v141 = vpack.c.b16 %v117, %v115
    %v142 = vpack.c.b16 %v120, %v118
    %v143 = vpack.c.b16 %v121, %v119
    %v144 = vpack.c.b16 %v124, %v122
    %v145 = vpack.c.b16 %v125, %v123
    %v146 = vpack.c.b16 %v128, %v126
    %v147 = vpack.c.b16 %v129, %v127
    %v148 = vpack.c.b16 %v132, %v130
    %v149 = vpack.c.b16 %v133, %v131
    %166 = vmatpush.bf16.msra.mxu0 %v148
    %167 = vmatpush.bf16.msra.mxu0 %v146
    %168 = vmatpush.bf16.msra.mxu0 %v144
    %169 = vmatpush.bf16.msra.mxu0 %v142
    %170 = vmatpush.bf16.msra.mxu0 %v140
    %171 = vmatpush.bf16.msra.mxu0 %v138
    %172 = vmatpush.bf16.msra.mxu0 %v136
    %173 = vmatpush.bf16.msra.mxu0 %v134
    %174 = vmatmul.bf16.gmra.mxu0 %v84
    %v175 = vpop.f32.mrf.mxu0
    %v176 = vadd.f32 0.0, %v175
    %v177 = vpop.f32.mrf.mxu0
    %v178 = vadd.f32 0.0, %v177
    %179 = vdwg.mxu0
    %180 = vmatpush.bf16.msra.mxu0 %v149
    %181 = vmatpush.bf16.msra.mxu0 %v147
    %182 = vmatpush.bf16.msra.mxu0 %v145
    %183 = vmatpush.bf16.msra.mxu0 %v143
    %184 = vmatpush.bf16.msra.mxu0 %v141
    %185 = vmatpush.bf16.msra.mxu0 %v139
    %186 = vmatpush.bf16.msra.mxu0 %v137
    %187 = vmatpush.bf16.msra.mxu0 %v135
    %188 = vmatmul.bf16.gmra.mxu0 %v84
    %v189 = vpop.f32.mrf.mxu0
    %v190 = vadd.f32 0.0, %v189
    %v191 = vpop.f32.mrf.mxu0
    %v192 = vadd.f32 0.0, %v191
    %193 = vdwg.mxu0
    %v194 = vxor.u32 %v176, 2147483648
    %v195 = vxor.u32 %v178, 2147483648
    %v196 = vmul.f32 %v194, 1.442695
    %v197 = vpow.pop %v196
    %v198 = vmul.f32 %v195, 1.442695
    %v199 = vpow.pop %v198
    %v200 = vadd.f32 %v197, 1.0
    %v201 = vadd.f32 %v199, 1.0
    %v202 = vrcp.pop %v200
    %v203 = vmul.f32 %v200, %v202
    %v204 = vsub.f32 1.0, %v203
    %v205 = vmul.f32 %v202, %v204
    %v206 = vadd.f32 %v202, %v205
    %vm207 = vweird.f32 %v200
    %vm208 = vweird.f32 %v202
    %vm209 = vmor %vm207, %vm208
    %v210 = vsel %vm209, %v202, %v206
    %v211 = vand.u32 2147483647, %v200
    %vm212 = vcmp.eq.f32.partialorder %v211, 8.507059e+37
    %v213 = vand.u32 %v200, 2147483648
    %v214 = vor.u32 1.1754944e-38, %v213
    %v215 = vsel %vm212, %v214, %v210
    %v216 = vmul.f32 1.0, %v215
    %v217 = vrcp.pop %v201
    %v218 = vmul.f32 %v201, %v217
    %v219 = vsub.f32 1.0, %v218
    %v220 = vmul.f32 %v217, %v219
    %v221 = vadd.f32 %v217, %v220
    %vm222 = vweird.f32 %v201
    %vm223 = vweird.f32 %v217
    %vm224 = vmor %vm222, %vm223
    %v225 = vsel %vm224, %v217, %v221
    %v226 = vand.u32 2147483647, %v201
    %vm227 = vcmp.eq.f32.partialorder %v226, 8.507059e+37
    %v228 = vand.u32 %v201, 2147483648
    %v229 = vor.u32 1.1754944e-38, %v228
    %v230 = vsel %vm227, %v229, %v225
    %v231 = vmul.f32 1.0, %v230
    %v232 = vmul.f32 %v176, %v216
    %v233 = vmul.f32 %v178, %v231
    %v234 = vmul.f32 %v232, %v190
    %v235 = vmul.f32 %v233, %v192
    %v236 = vpack.c.bf16 %v235, %v234
    %v237 = vld [vmem:[#allocation7] sm:$0xf]
    %v238 = vld [vmem:[#allocation7 + $0x4] sm:$0xf]
    %v239 = vld [vmem:[#allocation7 + $0x8] sm:$0xf]
    %v240 = vld [vmem:[#allocation7 + $0xc] sm:$0xf]
    %v241 = vld [vmem:[#allocation7 + $0x10] sm:$0xf]
    %v242 = vld [vmem:[#allocation7 + $0x14] sm:$0xf]
    %v243 = vld [vmem:[#allocation7 + $0x18] sm:$0xf]
    %v244 = vld [vmem:[#allocation7 + $0x1c] sm:$0xf]
    %v245 = vld [vmem:[#allocation7 + $0x20] sm:$0xf]
    %v246 = vld [vmem:[#allocation7 + $0x24] sm:$0xf]
    %v247 = vld [vmem:[#allocation7 + $0x28] sm:$0xf]
    %v248 = vld [vmem:[#allocation7 + $0x2c] sm:$0xf]
    %v249 = vld [vmem:[#allocation7 + $0x30] sm:$0xf]
    %v250 = vld [vmem:[#allocation7 + $0x34] sm:$0xf]
    %v251 = vld [vmem:[#allocation7 + $0x38] sm:$0xf]
    %v252 = vld [vmem:[#allocation7 + $0x3c] sm:$0xf]
    %v269 = vunpack.c.l.b16 %v237
    %v270 = vunpack.c.l.b16 %v238
    %v271 = vunpack.c.l.b16 %v239
    %v272 = vunpack.c.l.b16 %v240
    %v273 = vunpack.c.l.b16 %v241
    %v274 = vunpack.c.l.b16 %v242
    %v275 = vunpack.c.l.b16 %v243
    %v276 = vunpack.c.l.b16 %v244
    %v277 = vunpack.c.l.b16 %v245
    %v278 = vunpack.c.l.b16 %v246
    %v279 = vunpack.c.l.b16 %v247
    %v280 = vunpack.c.l.b16 %v248
    %v281 = vunpack.c.l.b16 %v249
    %v282 = vunpack.c.l.b16 %v250
    %v283 = vunpack.c.l.b16 %v251
    %v284 = vunpack.c.l.b16 %v252
    %v285 = vpack.c.b16 %v270, %v269
    %v286 = vpack.c.b16 %v272, %v271
    %v287 = vpack.c.b16 %v274, %v273
    %v288 = vpack.c.b16 %v276, %v275
    %v289 = vpack.c.b16 %v278, %v277
    %v290 = vpack.c.b16 %v280, %v279
    %v291 = vpack.c.b16 %v282, %v281
    %v292 = vpack.c.b16 %v284, %v283
    %301 = vmatpush.bf16.msra.mxu0 %v292
    %302 = vmatpush.bf16.msra.mxu0 %v291
    %303 = vmatpush.bf16.msra.mxu0 %v290
    %304 = vmatpush.bf16.msra.mxu0 %v289
    %305 = vmatpush.bf16.msra.mxu0 %v288
    %306 = vmatpush.bf16.msra.mxu0 %v287
    %307 = vmatpush.bf16.msra.mxu0 %v286
    %308 = vmatpush.bf16.msra.mxu0 %v285
    %309 = vmatmul.bf16.gmra.mxu0 %v236
    %v310 = vpop.f32.mrf.mxu0
    %v311 = vadd.f32 0.0, %v310
    %v312 = vpop.f32.mrf.mxu0
    %v313 = vadd.f32 0.0, %v312
    %314 = vdwg.mxu0
    %315 = vst [vmem:[#allocation8] sm:$0xff] %v311
    %316 = vst [vmem:[#allocation8 + $0x8] sm:$0xff] %v313
    // Predicated region
    $region26: #{tpu_custom_call.1} parent=1 // pred_check
      _
    $region27: #{tpu_custom_call.1} parent=1 // pred_check_branch
      %318 = sbr.rel (0) target = $region29
    $region28: #{tpu_custom_call.1} parent=1 // pred_region
      %320 = vsyncadd [#allocation4], 0
      %s321 = sshll.u32 [#allocation8], 4
      %s322 = int_to_ptr.vmem [resolvable:$true] %s321
      %s323 = sshll.u32 %s3, 4
      %s324 = int_to_ptr.hbm [resolvable:$true] %s323
      %329 = dma.vmem_to_hbm [thread:$0]  %s322, 256, %s324, [#allocation4], 128, 128, 8
    $region29: #{tpu_custom_call.1} parent=1 // pred_fallthru
      _
    // Predicated region
    $region30: #{tpu_custom_call.1} parent=1 // pred_check
      _
    $region31: #{tpu_custom_call.1} parent=1 // pred_check_branch
      %331 = sbr.rel (0) target = $region33
    $region32: #{tpu_custom_call.1} parent=1 // pred_region
      %333 = dma.done [#allocation4], 256
    $region33: #{tpu_custom_call.1} parent=1 // pred_fallthru
      _
    %334 = vsyncpa [#allocation3], 1
    %335 = vsyncpa [#allocation6], 1
    %336 = vsyncpa [#allocation4], 1

</llo_original>
